<compile_context>
chip_gen: v5e
topology: v5e:2x2
jax: 0.10.0
libtpu: 0.0.40
codegen_flags: <defaults>
</compile_context>

<pallas_src>
import jax
import jax.numpy as jnp
from jax.experimental import pallas as pl
from jax.experimental.pallas import tpu as pltpu


def _round_up(x, m):
    return ((x + m - 1) // m) * m


def _discriminator_kernel(x_ref, w1_ref, b1_ref, w2_ref, b2_ref, o_ref):
    # x_ref : (input_dim, TILE_B) f32   -- batch on lanes (lane-dense, streamed)
    # w1_ref: (hidden_p, input_dim) f32 -- resident across the whole grid
    # b1_ref: (hidden_p, 1) f32
    # w2_ref: (hidden_p, 1) f32
    # b2_ref: (1,) f32 in SMEM
    # o_ref : (1, TILE_B) f32           -- lane-dense output store
    h = jnp.dot(w1_ref[...], x_ref[...], preferred_element_type=jnp.float32)
    h = jnp.maximum(h + b1_ref[...], 0.0)                        # bias + ReLU (VPU)
    # hidden -> 1: VPU mul + sublane (XLU) reduce; padded hidden rows are zero.
    o_ref[...] = jnp.sum(h * w2_ref[...], axis=0, keepdims=True) + b2_ref[0]


def _pick_tile_b(batch, input_dim, hidden_p,
                 target_x_tile_bytes=2 << 20,    # ~2 MiB streamed x block
                 vmem_budget_bytes=12 << 20):    # conservative for v5e/v6e/v7x
    """Largest lane-aligned batch tile such that (a) the streamed x block is
    around target_x_tile_bytes, (b) the working set (incl. the f32 hidden
    intermediate) fits the VMEM budget, and (c) the grid keeps >= 2 steps for
    v7x megacore sharding when the batch allows."""
    if batch <= 128:
        return batch                                   # single full-extent block
    # VMEM bytes per batch column:
    #   double-buffered x block (2*input_dim*4) + f32 hidden intermediate plus a
    #   temporary copy (2*hidden_p*4) + double-buffered output block (2*4).
    per_col = 2 * input_dim * 4 + 2 * hidden_p * 4 + 2 * 4
    tb = min(target_x_tile_bytes // (input_dim * 4),
             vmem_budget_bytes // per_col)
    tb = min(tb, _round_up(pl.cdiv(batch, 2), 128))    # >= 2 grid steps
    tb = min(tb, (batch // 128) * 128)                 # only the tail is ragged
    return max(128, (tb // 128) * 128)                 # lane-aligned


@jax.jit
def discriminator_forward_xt(x_t, w1, b1, w2, b2):
    """Fast path. x_t: (input_dim, batch) f32 — the layout the producer should
    emit (no wrapper-side relayout pass). Params in PyTorch nn.Linear layout:
    w1 (25, input_dim), b1 (25,), w2 (1, 25), b2 (1,). Returns (batch, 1) f32."""
    input_dim, batch = x_t.shape
    hidden = w1.shape[0]
    hidden_p = _round_up(hidden, 8)

    tb = _pick_tile_b(batch, input_dim, hidden_p)
    assert tb == batch or tb % 128 == 0
    grid = (pl.cdiv(batch, tb),)        # ragged last block: no explicit padding

    # Tiny parameter relayouts (a few KiB; fused by XLA). Padded hidden rows
    # carry zero weight/bias so they contribute nothing.
    w1_p = jnp.zeros((hidden_p, input_dim), jnp.float32).at[:hidden].set(
        w1.astype(jnp.float32))
    b1_p = jnp.zeros((hidden_p, 1), jnp.float32).at[:hidden, 0].set(b1)
    w2_p = jnp.zeros((hidden_p, 1), jnp.float32).at[:hidden, 0].set(w2[0])
    b2_p = b2.astype(jnp.float32).reshape((1,))

    out = pl.pallas_call(
        _discriminator_kernel,
        out_shape=jax.ShapeDtypeStruct((1, batch), jnp.float32),
        grid=grid,
        in_specs=[
            pl.BlockSpec((input_dim, tb), lambda i: (0, i)),        # x (streamed)
            pl.BlockSpec((hidden_p, input_dim), lambda i: (0, 0)),  # w1 (resident)
            pl.BlockSpec((hidden_p, 1), lambda i: (0, 0)),          # b1 (resident)
            pl.BlockSpec((hidden_p, 1), lambda i: (0, 0)),          # w2 (resident)
            pl.BlockSpec(memory_space=pltpu.MemorySpace.SMEM),      # b2 (scalar)
        ],
        out_specs=pl.BlockSpec((1, tb), lambda i: (0, i)),
        compiler_params=pltpu.CompilerParams(
            dimension_semantics=("parallel",),
            vmem_limit_bytes=32 * 1024 * 1024),
    )(x_t, w1_p, b1_p, w2_p, b2_p)

    # (1, batch) -> (batch, 1): contiguous reshape, negligible.
    return jnp.reshape(out, (batch, 1))


@jax.jit
def discriminator_forward(x, w1, b1, w2, b2):
    """PyTorch-layout compatibility wrapper: x (batch, input_dim) f32.
    NOTE: the transpose below is one extra relayout pass over x; for large
    batches have the producer emit (input_dim, batch) f32 and call
    discriminator_forward_xt directly."""
    return discriminator_forward_xt(x.T, w1, b1, w2, b2)


def init_params(key, input_dim, hidden=25, out=1):
    """PyTorch nn.Linear default init: U(-1/sqrt(fan_in), 1/sqrt(fan_in)).
    Weights stored in PyTorch layout [out_features, in_features]."""
    k1, k2, k3, k4 = jax.random.split(key, 4)
    bound1 = 1.0 / jnp.sqrt(jnp.float32(input_dim))
    bound2 = 1.0 / jnp.sqrt(jnp.float32(hidden))
    w1 = jax.random.uniform(k1, (hidden, input_dim), jnp.float32, -bound1, bound1)
    b1 = jax.random.uniform(k2, (hidden,), jnp.float32, -bound1, bound1)
    w2 = jax.random.uniform(k3, (out, hidden), jnp.float32, -bound2, bound2)
    b2 = jax.random.uniform(k4, (out,), jnp.float32, -bound2, bound2)
    return w1, b1, w2, b2


if __name__ == "__main__":
    key = jax.random.PRNGKey(0)
    kx, kx2, kp = jax.random.split(key, 3)

    input_dim = 8  # a 1-D GAN "sample" is input_dim points on a curve
    w1, b1, w2, b2 = init_params(kp, input_dim)

    def ref_fwd(x):  # pure-JAX f32 reference, same math as the PyTorch forward
        return jnp.maximum(x @ w1.T + b1, 0.0) @ w2.T + b2

    # Small batch: single full-extent block path.
    x_small = jax.random.normal(kx, (64, input_dim), jnp.float32)
    out_small = jax.block_until_ready(
        discriminator_forward(x_small, w1, b1, w2, b2))
    ref_small = ref_fwd(x_small)
    assert out_small.shape == (64, 1)
    assert jnp.allclose(out_small, ref_small, atol=2e-2, rtol=2e-2), (
        float(jnp.max(jnp.abs(out_small - ref_small))))

    # Larger batch: multi-step grid + ragged last block, using the producer-
    # layout fast path (no wrapper relayout pass).
    x_big_t = jax.random.normal(kx2, (input_dim, 300), jnp.float32)
    out_big = jax.block_until_ready(
        discriminator_forward_xt(x_big_t, w1, b1, w2, b2))
    ref_big = ref_fwd(x_big_t.T)
    assert out_big.shape == (300, 1)
    assert jnp.allclose(out_big, ref_big, atol=2e-2, rtol=2e-2), (
        float(jnp.max(jnp.abs(out_big - ref_big))))

    print("KERNEL_OK")
</pallas_src>

<mosaic_0001>
module attributes {stable_mosaic.version = 11 : i64} {
  func.func @_discriminator_kernel(%arg0: i32, %arg1: memref<8x64xf32, #tpu.memory_space<vmem>>, %arg2: memref<32x8xf32, #tpu.memory_space<vmem>>, %arg3: memref<32x1xf32, #tpu.memory_space<vmem>>, %arg4: memref<32x1xf32, #tpu.memory_space<vmem>>, %arg5: memref<1xf32, #tpu.memory_space<smem>>, %arg6: memref<1x64xf32, #tpu.memory_space<vmem>>) attributes {dimension_semantics = [#tpu.dimension_semantics<parallel>], iteration_bounds = array<i64: 1>, scalar_prefetch = 0 : i64, scratch_operands = 0 : i64, tpu.core_type = #tpu.core_type<tc>, window_params = [{transform_indices = @transform_0, window_bounds = array<i64: 8, 64>}, {pipeline_mode = #tpu.pipeline_mode<synchronous>, transform_indices = @transform_1, window_bounds = array<i64: 32, 8>}, {pipeline_mode = #tpu.pipeline_mode<synchronous>, transform_indices = @transform_2, window_bounds = array<i64: 32, 1>}, {pipeline_mode = #tpu.pipeline_mode<synchronous>, transform_indices = @transform_3, window_bounds = array<i64: 32, 1>}, {transform_indices = @transform_4, window_bounds = array<i64: 1>}, {transform_indices = @transform_5, window_bounds = array<i64: 1, 64>}]} {
    %c0 = arith.constant 0 : index
    %c0_0 = arith.constant 0 : index
    %0 = vector.load %arg2[%c0, %c0_0] : memref<32x8xf32, #tpu.memory_space<vmem>>, vector<32x8xf32>
    %c0_1 = arith.constant 0 : index
    %c0_2 = arith.constant 0 : index
    %1 = vector.load %arg1[%c0_1, %c0_2] : memref<8x64xf32, #tpu.memory_space<vmem>>, vector<8x64xf32>
    %cst = arith.constant dense<0.000000e+00> : vector<32x64xf32>
    %2 = tpu.matmul %0, %1, %cst {dimension_numbers = #tpu.dot_dimension_numbers<[1], [0], [0], [1], [0, 0, 1, 1], [], []>} : vector<32x8xf32>, vector<8x64xf32>, vector<32x64xf32> -> vector<32x64xf32>
    %c0_3 = arith.constant 0 : index
    %c0_4 = arith.constant 0 : index
    %3 = vector.load %arg3[%c0_3, %c0_4] : memref<32x1xf32, #tpu.memory_space<vmem>>, vector<32x1xf32>
    %4 = vector.broadcast %3 : vector<32x1xf32> to vector<32x64xf32>
    %5 = arith.addf %2, %4 : vector<32x64xf32>
    %cst_5 = arith.constant 0.000000e+00 : f32
    %6 = vector.broadcast %cst_5 : f32 to vector<32x64xf32>
    %7 = arith.maximumf %5, %6 : vector<32x64xf32>
    %c0_6 = arith.constant 0 : index
    %c0_7 = arith.constant 0 : index
    %8 = vector.load %arg4[%c0_6, %c0_7] : memref<32x1xf32, #tpu.memory_space<vmem>>, vector<32x1xf32>
    %9 = vector.broadcast %8 : vector<32x1xf32> to vector<32x64xf32>
    %10 = arith.mulf %7, %9 : vector<32x64xf32>
    %cst_8 = arith.constant dense<0.000000e+00> : vector<64xf32>
    %11 = vector.multi_reduction <add>, %10, %cst_8 [0] : vector<32x64xf32> to vector<64xf32>
    %12 = vector.shape_cast %11 : vector<64xf32> to vector<1x64xf32>
    %c0_9 = arith.constant 0 : index
    %13 = memref.load %arg5[%c0_9] : memref<1xf32, #tpu.memory_space<smem>>
    %14 = vector.broadcast %13 : f32 to vector<1x64xf32>
    %15 = arith.addf %12, %14 : vector<1x64xf32>
    %c0_10 = arith.constant 0 : index
    %c0_11 = arith.constant 0 : index
    %16 = vector.load %arg6[%c0_10, %c0_11] : memref<1x64xf32, #tpu.memory_space<vmem>>, vector<1x64xf32>
    tpu.vector_store %arg6[%c0_10, %c0_11], %15 {strides = array<i32>} : memref<1x64xf32, #tpu.memory_space<vmem>>, vector<1x64xf32>,
    return
  }
  func.func @transform_0(%arg0: i32) -> (i32, i32) {
    %c0_i32 = arith.constant 0 : i32
    %c0_i32_0 = arith.constant 0 : i32
    return %c0_i32, %arg0 : i32, i32
  }
  func.func @transform_1(%arg0: i32) -> (i32, i32) {
    %c0_i32 = arith.constant 0 : i32
    %c0_i32_0 = arith.constant 0 : i32
    %c0_i32_1 = arith.constant 0 : i32
    return %c0_i32, %c0_i32_0 : i32, i32
  }
  func.func @transform_2(%arg0: i32) -> (i32, i32) {
    %c0_i32 = arith.constant 0 : i32
    %c0_i32_0 = arith.constant 0 : i32
    %c0_i32_1 = arith.constant 0 : i32
    return %c0_i32, %c0_i32_0 : i32, i32
  }
  func.func @transform_3(%arg0: i32) -> (i32, i32) {
    %c0_i32 = arith.constant 0 : i32
    %c0_i32_0 = arith.constant 0 : i32
    %c0_i32_1 = arith.constant 0 : i32
    return %c0_i32, %c0_i32_0 : i32, i32
  }
  func.func @transform_4(%arg0: i32) -> i32 {
    %c0_i32 = arith.constant 0 : i32
    %c0_i32_0 = arith.constant 0 : i32
    return %c0_i32 : i32
  }
  func.func @transform_5(%arg0: i32) -> (i32, i32) {
    %c0_i32 = arith.constant 0 : i32
    %c0_i32_0 = arith.constant 0 : i32
    return %c0_i32, %arg0 : i32, i32
  }
}

</mosaic_0001>

<llo_original>
// kernel: discriminator_forward_xt.1
$region0: #{discriminator_forward_xt.1}
  #allocation0 [shape = 'u32[]', space=smem, size = 0x4, offset = 0x4, fixed_abs, tag = 'smem constant byte address 0x4 - core index']
  #allocation1 [shape = 'u32[72,128]{1,0:T(1,128)}', space=vmem, size = 0x9000, scoped, tag = 'internal scratch']
  #allocation2 [shape = 'f32[1]{0:T(128)S(6)}', space=smem, size = 0x200, scoped, tag = 'scoped memory for discriminator_forward_xt.1']
  %s0 = inlined_call_operand.vmem [shape: f32[8,64], index: 0, kind: input, shape index: {}]
  %s1 = inlined_call_operand.vmem [shape: f32[32,8], index: 1, kind: input, shape index: {}]
  %s2 = inlined_call_operand.vmem [shape: f32[32,1], index: 2, kind: input, shape index: {}]
  %s3 = inlined_call_operand.vmem [shape: f32[32,1], index: 3, kind: input, shape index: {}]
  %s4 = inlined_call_operand.<no memory space> [shape: f32[1], index: 4, kind: input, shape index: {}]
  %s5 = inlined_call_operand.hbm [shape: f32[1,64], index: 5, kind: output, shape index: {}]
  %s6 = sld [smem:[#allocation0]]
  $region30: #{discriminator_forward_xt.1} parent=0
    _
  %s8 = ssub.s32 1, %s6
  %s9 = scalar_select 0, %s8, %s6
  %10 = sst [smem:[#allocation2]] %s4
  $region1: #{discriminator_forward_xt.1} parent=0
    #allocation3 [shape = 'u8[512]{0}', space=vmem, size = 0x400, scoped, tag = 'output window, operand 0, single buffered']
    #allocation4 [shape = 's32[1]{0}', space=sflag, size = 0x4, scoped, tag = 'scoped memory for discriminator_forward_xt.1']
    %11 = vsyncpa [#allocation4], 0
    // Predicated region
    $region2: #{discriminator_forward_xt.1} parent=1 // pred_check
      _
    $region3: #{discriminator_forward_xt.1} parent=1 // pred_check_branch
      %13 = sbr.rel (0) target = $region5
    $region4: #{discriminator_forward_xt.1} parent=1 // pred_region
      _
    $region5: #{discriminator_forward_xt.1} parent=1 // pred_fallthru
      _
    // Predicated region
    $region6: #{discriminator_forward_xt.1} parent=1 // pred_check
      _
    $region7: #{discriminator_forward_xt.1} parent=1 // pred_check_branch
      %15 = sbr.rel (0) target = $region9
    $region8: #{discriminator_forward_xt.1} parent=1 // pred_region
      _
    $region9: #{discriminator_forward_xt.1} parent=1 // pred_fallthru
      _
    // Predicated region
    $region10: #{discriminator_forward_xt.1} parent=1 // pred_check
      _
    $region11: #{discriminator_forward_xt.1} parent=1 // pred_check_branch
      %17 = sbr.rel (0) target = $region13
    $region12: #{discriminator_forward_xt.1} parent=1 // pred_region
      _
    $region13: #{discriminator_forward_xt.1} parent=1 // pred_fallthru
      _
    // Predicated region
    $region14: #{discriminator_forward_xt.1} parent=1 // pred_check
      _
    $region15: #{discriminator_forward_xt.1} parent=1 // pred_check_branch
      %19 = sbr.rel (0) target = $region17
    $region16: #{discriminator_forward_xt.1} parent=1 // pred_region
      _
    $region17: #{discriminator_forward_xt.1} parent=1 // pred_fallthru
      _
    // Predicated region
    $region18: #{discriminator_forward_xt.1} parent=1 // pred_check
      _
    $region19: #{discriminator_forward_xt.1} parent=1 // pred_check_branch
      %21 = sbr.rel (0) target = $region21
    $region20: #{discriminator_forward_xt.1} parent=1 // pred_region
      _
    $region21: #{discriminator_forward_xt.1} parent=1 // pred_fallthru
      _
    %v22 = vld [vmem:[%s1] sm:$0xff]
    %v23 = vld [vmem:[%s1 + $0x8] sm:$0xff]
    %v24 = vld [vmem:[%s1 + $0x10] sm:$0xff]
    %v25 = vld [vmem:[%s1 + $0x18] sm:$0xff]
    %v26 = vld [vmem:[%s0] sm:$0xff]
    %v27 = vld [vmem:[%s2] sm:$0xff]
    %v28 = vld [vmem:[%s2 + $0x8] sm:$0xff]
    %v29 = vld [vmem:[%s2 + $0x10] sm:$0xff]
    %v30 = vld [vmem:[%s2 + $0x18] sm:$0xff]
    %32 = vset.pattern.permute.xlu0 0
    %33 = vperm.xlu0 %32, %v27
    %v34 = vpop.permute.xlu0 %33
    %37 = vset.pattern.permute.xlu0 0
    %38 = vperm.xlu0 %37, %v28
    %v39 = vpop.permute.xlu0 %38
    %42 = vset.pattern.permute.xlu0 0
    %43 = vperm.xlu0 %42, %v29
    %v44 = vpop.permute.xlu0 %43
    %47 = vset.pattern.permute.xlu0 0
    %48 = vperm.xlu0 %47, %v30
    %v49 = vpop.permute.xlu0 %48
    %vm51 = vcmask 64512
    %v53 = vsel %vm51, %v22, 0
    %v56 = vsel %vm51, %v23, 0
    %v59 = vsel %vm51, %v24, 0
    %v62 = vsel %vm51, %v25, 0
    %64 = vmatpush.msra.mxu0 0.0
    %65 = vmatpush.msra.mxu0 0.0
    %66 = vmatpush.msra.mxu0 0.0
    %67 = vmatpush.msra.mxu0 0.0
    %68 = vmatpush.msra.mxu0 0.0
    %69 = vmatpush.msra.mxu0 0.0
    %70 = vmatpush.msra.mxu0 0.0
    %71 = vmatpush.msra.mxu0 0.0
    %72 = vmatpush.msra.mxu0 0.0
    %73 = vmatpush.msra.mxu0 0.0
    %74 = vmatpush.msra.mxu0 0.0
    %75 = vmatpush.msra.mxu0 0.0
    %76 = vmatpush.msra.mxu0 0.0
    %77 = vmatpush.msra.mxu0 0.0
    %78 = vmatpush.msra.mxu0 0.0
    %79 = vmatpush.msra.mxu0 %v26
    %80 = vmatmul.f32.gmra.mxu0 %v53
    %v81 = vpop.f32.mrf.mxu0
    %v82 = vadd.f32 %v34, %v81
    %83 = vmatmul.f32.gmra.mxu0 %v56
    %v84 = vpop.f32.mrf.mxu0
    %v85 = vadd.f32 %v39, %v84
    %86 = vmatmul.f32.gmra.mxu0 %v59
    %v87 = vpop.f32.mrf.mxu0
    %v88 = vadd.f32 %v44, %v87
    %89 = vmatmul.f32.gmra.mxu0 %v62
    %v90 = vpop.f32.mrf.mxu0
    %v91 = vadd.f32 %v49, %v90
    %92 = vdwg.mxu0
    %v93 = vmax.f32 %v82, 0.0
    %v94 = vmax.f32 %v85, 0.0
    %v95 = vmax.f32 %v88, 0.0
    %v96 = vmax.f32 %v91, 0.0
    %v97 = vld [vmem:[%s3] sm:$0xff]
    %v98 = vld [vmem:[%s3 + $0x8] sm:$0xff]
    %v99 = vld [vmem:[%s3 + $0x10] sm:$0xff]
    %v100 = vld [vmem:[%s3 + $0x18] sm:$0xff]
    %102 = vset.pattern.permute.xlu0 0
    %103 = vperm.xlu0 %102, %v97
    %v104 = vpop.permute.xlu0 %103
    %107 = vset.pattern.permute.xlu0 0
    %108 = vperm.xlu0 %107, %v98
    %v109 = vpop.permute.xlu0 %108
    %112 = vset.pattern.permute.xlu0 0
    %113 = vperm.xlu0 %112, %v99
    %v114 = vpop.permute.xlu0 %113
    %117 = vset.pattern.permute.xlu0 0
    %118 = vperm.xlu0 %117, %v100
    %v119 = vpop.permute.xlu0 %118
    %v121 = vmul.f32 %v93, %v104
    %v122 = vmul.f32 %v94, %v109
    %v123 = vmul.f32 %v95, %v114
    %v124 = vmul.f32 %v96, %v119
    %vm125 = vcmask 523264
    %v126 = vsel %vm125, %v121, 0.0
    %v127 = vsel %vm125, %v122, 0.0
    %v128 = vadd.f32 %v126, %v127
    %v129 = vsel %vm125, %v123, 0.0
    %v130 = vadd.f32 %v128, %v129
    %v131 = vsel %vm125, %v124, 0.0
    %v132 = vadd.f32 %v130, %v131
    %v133 = vrot.slane %v132, 4
    %v134 = vadd.f32 %v132, %v133
    %v135 = vrot.slane %v134, 2
    %v136 = vadd.f32 %v134, %v135
    %v137 = vrot.slane %v136, 1
    %v138 = vadd.f32 %v136, %v137
    %s139 = sld [smem:[#allocation2]]
    %v140 = vstv %s139
    %v141 = vadd.f32 %v138, %v140
    %vm142 = vcmask 516096
    %143 = vst.msk [vmem:[#allocation3] sm:$0x1] %vm142, %v141
    // Predicated region
    $region22: #{discriminator_forward_xt.1} parent=1 // pred_check
      _
    $region23: #{discriminator_forward_xt.1} parent=1 // pred_check_branch
      %145 = sbr.rel (0) target = $region25
    $region24: #{discriminator_forward_xt.1} parent=1 // pred_region
      %147 = vsyncadd [#allocation4], 0
      %s149 = sshll.u32 [#allocation3], 4
      %s150 = int_to_ptr.vmem [resolvable:$true] %s149
      %s151 = sshll.u32 %s5, 4
      %s152 = int_to_ptr.hbm [resolvable:$true] %s151
      %154 = dma.vmem_to_hbm [thread:$0]  %s150, 16, %s152, [#allocation4]
    $region25: #{discriminator_forward_xt.1} parent=1 // pred_fallthru
      _
    // Predicated region
    $region26: #{discriminator_forward_xt.1} parent=1 // pred_check
      _
    $region27: #{discriminator_forward_xt.1} parent=1 // pred_check_branch
      %156 = sbr.rel (0) target = $region29
    $region28: #{discriminator_forward_xt.1} parent=1 // pred_region
      %158 = dma.done [#allocation4], 16
    $region29: #{discriminator_forward_xt.1} parent=1 // pred_fallthru
      _
    %159 = vsyncpa [#allocation4], 1

</llo_original>
